<compile_context>
chip_gen: v7x
topology: tpu7x:2x2x1
jax: 0.10.0
libtpu: 0.0.40
codegen_flags: <defaults>
</compile_context>

<pallas_src>
import jax
import jax.numpy as jnp
from jax.experimental import pallas as pl
from jax.experimental.pallas import tpu as pltpu


# -----------------------------------------------------------------------------
# Parameter init (mirrors NoiseModule.__init__): noise = normalize(randn(...)).
# F.normalize default: L2 norm along dim=1, eps=1e-12 (clamp_min).
# -----------------------------------------------------------------------------
def make_noise_param(key, num=32, for_fc=False):
    if for_fc:
        noise = jax.random.normal(key, (1, num), dtype=jnp.float32)
    else:
        noise = jax.random.normal(key, (1, num, 1), dtype=jnp.float32)
    norm = jnp.sqrt(jnp.sum(noise * noise, axis=1, keepdims=True))
    return noise / jnp.maximum(norm, 1e-12)


# -----------------------------------------------------------------------------
# Pallas kernel: elementwise pass-through (identity forward).
# -----------------------------------------------------------------------------
def _copy_kernel(x_ref, o_ref):
    o_ref[...] = x_ref[...]


def _round_up(x, m):
    return (x + m - 1) // m * m


def _pick_lane_tile(cols_p):
    for cand in (2048, 1024, 512, 256, 128):
        if cols_p % cand == 0:
            return cand
    return cols_p  # cols_p is already a multiple of 128, so unreachable


def noise_module_forward(x):
    """Forward pass of NoiseModule: identity. x is NCHW.

    NOTE: semantically this could simply `return x`; the Pallas pass-through
    below exists to exercise the kernel path with aliased, tiled I/O.
    """
    n, c, h, w = x.shape
    rows, cols = n * c, h * w
    x2d = x.reshape(rows, cols)

    # Pad to an (8, 128)-aligned slab (no-op when already aligned). This keeps
    # every block lane-dense and avoids any whole-array VMEM fallback.
    rows_p = _round_up(rows, 8)
    cols_p = _round_up(cols, 128)
    padded = (rows_p != rows) or (cols_p != cols)
    if padded:
        x2d = jnp.pad(x2d, ((0, rows_p - rows), (0, cols_p - cols)))

    itemsize = jnp.dtype(x.dtype).itemsize

    # Lane tile: multiple of 128, capped at 2048 lanes.
    tn = _pick_lane_tile(cols_p)

    # Sublane tile: target ~2 MiB per block (2 refs x 2 pipeline buffers
    # => ~8 MiB VMEM, safe on v5e/v6e/v7x), multiple of 8.
    tm_cap = max(8, (2 * 1024 * 1024) // (tn * itemsize))
    tm = 8
    for cand in (1024, 512, 256, 128, 64, 32, 16, 8):
        if cand <= tm_cap and rows_p % cand == 0:
            tm = cand
            break

    grid = (rows_p // tm, cols_p // tn)

    out2d = pl.pallas_call(
        _copy_kernel,
        out_shape=jax.ShapeDtypeStruct((rows_p, cols_p), x.dtype),
        grid=grid,
        in_specs=[pl.BlockSpec((tm, tn), lambda i, j: (i, j))],
        out_specs=pl.BlockSpec((tm, tn), lambda i, j: (i, j)),
        # Output aliases the input buffer: no second HBM array when the
        # (reshaped / padded) input is dead after the call.
        input_output_aliases={0: 0},
        compiler_params=pltpu.CompilerParams(
            dimension_semantics=("parallel", "parallel"),
            vmem_limit_bytes=32 * 1024 * 1024,
        ),
    )(x2d)

    if padded:
        out2d = out2d[:rows, :cols]
    return out2d.reshape(n, c, h, w)


if __name__ == "__main__":
    key = jax.random.PRNGKey(0)
    k_noise, k_x = jax.random.split(key)

    # Constructed as the module does, but unused in forward (matches PyTorch).
    noise_param = make_noise_param(k_noise, num=32, for_fc=False)

    # Small NCHW input consistent with a conv-style module.
    x = jax.random.normal(k_x, (2, 4, 16, 16), dtype=jnp.float32)

    fwd = jax.jit(noise_module_forward)
    y = jax.block_until_ready(fwd(x))

    assert y.shape == x.shape
    assert jnp.allclose(y, x), "identity forward mismatch"
    print("KERNEL_OK")
</pallas_src>

<mosaic_0001>
module attributes {stable_mosaic.version = 11 : i64} {
  func.func @_copy_kernel(%arg0: i32, %arg1: i32, %arg2: memref<8x256xf32, #tpu.memory_space<vmem>>, %arg3: memref<8x256xf32, #tpu.memory_space<vmem>>) attributes {dimension_semantics = [#tpu.dimension_semantics<parallel>, #tpu.dimension_semantics<parallel>], iteration_bounds = array<i64: 1, 1>, scalar_prefetch = 0 : i64, scratch_operands = 0 : i64, tpu.core_type = #tpu.core_type<tc>, window_params = [{transform_indices = @transform_0, window_bounds = array<i64: 8, 256>}, {transform_indices = @transform_1, window_bounds = array<i64: 8, 256>}]} {
    %c0 = arith.constant 0 : index
    %c0_0 = arith.constant 0 : index
    %0 = vector.load %arg2[%c0, %c0_0] : memref<8x256xf32, #tpu.memory_space<vmem>>, vector<8x256xf32>
    %c0_1 = arith.constant 0 : index
    %c0_2 = arith.constant 0 : index
    %1 = vector.load %arg3[%c0_1, %c0_2] : memref<8x256xf32, #tpu.memory_space<vmem>>, vector<8x256xf32>
    tpu.vector_store %arg3[%c0_1, %c0_2], %0 {strides = array<i32>} : memref<8x256xf32, #tpu.memory_space<vmem>>, vector<8x256xf32>,
    return
  }
  func.func @transform_0(%arg0: i32, %arg1: i32) -> (i32, i32) {
    %c0_i32 = arith.constant 0 : i32
    return %arg0, %arg1 : i32, i32
  }
  func.func @transform_1(%arg0: i32, %arg1: i32) -> (i32, i32) {
    %c0_i32 = arith.constant 0 : i32
    return %arg0, %arg1 : i32, i32
  }
}

</mosaic_0001>

<llo_original>
// kernel: noise_module_forward.1
$region0: #{noise_module_forward.1}
  #allocation0 [shape = 'u32[]', space=smem, size = 0x4, offset = 0x4, fixed_abs, tag = 'smem constant byte address 0x4 - core index']
  #allocation1 [shape = 'u32[144,128]{1,0:T(1,128)}', space=vmem, size = 0x12000, scoped, tag = 'internal scratch']
  %s0 = inlined_call_operand.vmem [shape: f32[8,256], index: 0, kind: input, shape index: {}, may-alias: {0,1}]
  %s1 = inlined_call_operand.vmem [shape: f32[8,256], index: 1, kind: output, shape index: {}, may-alias: {0,1}]
  %s2 = sld [smem:[#allocation0]]
  $region14: #{noise_module_forward.1} parent=0
    _
  %s4 = ssub.s32 1, %s2
  %s5 = scalar_select 0, %s4, %s2
  // Predicated region
  $region2: #{noise_module_forward.1} parent=0 // pred_check
    _
  $region3: #{noise_module_forward.1} parent=0 // pred_check_branch
    %7 = sbr.rel (0) target = $region5
  $region4: #{noise_module_forward.1} parent=0 // pred_region
    _
  $region5: #{noise_module_forward.1} parent=0 // pred_fallthru
    _
  %v8 = vld [vmem:[%s0] sm:$0xff]
  %v9 = vld [vmem:[%s0 + $0x8] sm:$0xff]
  %10 = vst [vmem:[%s1] sm:$0xff] %v8
  %11 = vst [vmem:[%s1 + $0x8] sm:$0xff] %v9
  // Predicated region
  $region6: #{noise_module_forward.1} parent=0 // pred_check
    _
  $region7: #{noise_module_forward.1} parent=0 // pred_check_branch
    %13 = sbr.rel (0) target = $region9
  $region8: #{noise_module_forward.1} parent=0 // pred_region
    _
  $region9: #{noise_module_forward.1} parent=0 // pred_fallthru
    _
  // Predicated region
  $region10: #{noise_module_forward.1} parent=0 // pred_check
    _
  $region11: #{noise_module_forward.1} parent=0 // pred_check_branch
    %15 = sbr.rel (0) target = $region13
  $region12: #{noise_module_forward.1} parent=0 // pred_region
    _
  $region13: #{noise_module_forward.1} parent=0 // pred_fallthru
    _

</llo_original>
